<compile_context>
chip_gen: v7x
topology: tpu7x:2x2x1
jax: 0.10.0
libtpu: 0.0.40
codegen_flags: <defaults>
</compile_context>

<pallas_src>
import functools
import math

import jax
import jax.numpy as jnp
from jax.experimental import pallas as pl
from jax.experimental.pallas import tpu as pltpu


def _round_up(x, m):
    return ((x + m - 1) // m) * m


def _pow2_tile(n_p, requested):
    """Largest power-of-two multiple of 128 that divides n_p and is <= requested."""
    requested = max(128, requested)
    t = 128
    while t * 2 <= requested and n_p % (t * 2) == 0:
        t *= 2
    return min(t, n_p)


# ---------------- fused small-graph path ----------------

def _fused_kernel(x_ref, w_ref, adj_ref, b_ref, o_ref):
    support = jnp.dot(
        x_ref[...].astype(jnp.bfloat16),
        w_ref[...].astype(jnp.bfloat16),
        preferred_element_type=jnp.float32,
    )
    agg = jnp.dot(
        adj_ref[...].astype(jnp.bfloat16),
        support.astype(jnp.bfloat16),
        preferred_element_type=jnp.float32,
    )
    o_ref[...] = (agg + b_ref[...]).astype(o_ref.dtype)


def _fused(x, w, adj, bias2d, out_dtype):
    N = x.shape[0]
    f_out = w.shape[1]
    # No grid: whole arrays live in VMEM for a single kernel invocation.
    return pl.pallas_call(
        _fused_kernel,
        out_shape=jax.ShapeDtypeStruct((N, f_out), out_dtype),
    )(x, w, adj, bias2d)


# ---------------- pass 1: support = x @ W ----------------

def _support_kernel(x_ref, w_ref, o_ref):
    o_ref[...] = jnp.dot(
        x_ref[...].astype(jnp.bfloat16),
        w_ref[...].astype(jnp.bfloat16),
        preferred_element_type=jnp.float32,
    )


def _compute_support(x_p, w_p, *, bm, bn):
    n_p, f_in_p = x_p.shape
    f_out_p = w_p.shape[1]
    # TODO(synk): tile the F_in contraction (extra grid axis + f32 accumulator)
    # if in_features grows beyond a single VMEM block (needed for v7x 64 MiB).
    return pl.pallas_call(
        _support_kernel,
        out_shape=jax.ShapeDtypeStruct((n_p, f_out_p), jnp.float32),
        grid_spec=pltpu.PrefetchScalarGridSpec(
            num_scalar_prefetch=0,
            grid=(n_p // bm, f_out_p // bn),
            in_specs=[
                pl.BlockSpec((bm, f_in_p), lambda i, j: (i, 0)),
                pl.BlockSpec((f_in_p, bn), lambda i, j: (0, j)),
            ],
            out_specs=pl.BlockSpec((bm, bn), lambda i, j: (i, j)),
        ),
        compiler_params=pltpu.CompilerParams(
            dimension_semantics=("parallel", "parallel"),
            vmem_limit_bytes=48 * 1024 * 1024,
        ),
    )(x_p, w_p)


# ---------------- pass 2: out = adj @ support + bias ----------------

def _aggregate_kernel(adj_ref, s_ref, b_ref, o_ref, acc_ref):
    k = pl.program_id(1)

    @pl.when(k == 0)
    def _():
        acc_ref[...] = jnp.zeros_like(acc_ref)

    # In-kernel bf16 casts: adj / support keep their HBM dtype, the VPU cast
    # hides under the tile DMA, accumulation stays f32 on the MXU.
    acc_ref[...] += jnp.dot(
        adj_ref[...].astype(jnp.bfloat16),
        s_ref[...].astype(jnp.bfloat16),
        preferred_element_type=jnp.float32,
    )

    # Minimal epilogue: bias add + dtype cast once, on the final k step only.
    @pl.when(k == pl.num_programs(1) - 1)
    def _():
        o_ref[...] = (acc_ref[...] + b_ref[...]).astype(o_ref.dtype)


def _aggregate(adj_p, support_p, bias_p, out_dtype, *, bm, bk):
    n_p = adj_p.shape[0]
    f_out_p = support_p.shape[1]
    # TODO(synk): add an F_out grid axis here (and/or a VMEM-resident support
    # block) if out_features grows beyond ~1024.
    return pl.pallas_call(
        _aggregate_kernel,
        out_shape=jax.ShapeDtypeStruct((n_p, f_out_p), out_dtype),
        grid_spec=pltpu.PrefetchScalarGridSpec(
            num_scalar_prefetch=0,
            grid=(n_p // bm, n_p // bk),
            in_specs=[
                pl.BlockSpec((bm, bk), lambda i, k: (i, k)),        # adj tile
                pl.BlockSpec((bk, f_out_p), lambda i, k: (k, 0)),   # support tile
                pl.BlockSpec((1, f_out_p), lambda i, k: (0, 0)),    # bias (f32)
            ],
            out_specs=pl.BlockSpec((bm, f_out_p), lambda i, k: (i, 0)),
            scratch_shapes=[pltpu.VMEM((bm, f_out_p), jnp.float32)],
        ),
        compiler_params=pltpu.CompilerParams(
            dimension_semantics=("parallel", "arbitrary"),
            vmem_limit_bytes=48 * 1024 * 1024,
        ),
    )(adj_p, support_p, bias_p)


# ---------------- public wrapper ----------------

@functools.partial(
    jax.jit, static_argnames=("block_m", "block_k", "fused_threshold_bytes")
)
def graph_convolution(
    x, w, adj, bias=None, *, block_m=2048, block_k=1024,
    fused_threshold_bytes=8 * 1024 * 1024,
):
    """GCN forward: adj @ (x @ w) + bias.

    x: (N, F_in), w: (F_in, F_out), adj: (N, N) dense, bias: (F_out,) or None.
    Returns (N, F_out) in x.dtype.
    """
    N, F_in = x.shape
    F_out = w.shape[1]
    out_dtype = x.dtype

    if bias is None:
        bias2d = jnp.zeros((1, F_out), jnp.float32)
    else:
        bias2d = bias.astype(jnp.float32).reshape(1, F_out)

    # Small-graph fused fast path: everything fits one VMEM tile -> one launch,
    # no padding passes, no support HBM round trip.
    approx_bytes = 4 * (N * F_in + F_in * F_out + N * N + 2 * N * F_out + F_out)
    if approx_bytes <= fused_threshold_bytes:
        return _fused(x, w, adj, bias2d, out_dtype)

    # ---- large-graph tiled two-pass path ----
    f_in_p = _round_up(F_in, 128)
    f_out_p = _round_up(F_out, 128)
    n_p = _round_up(N, 128)

    # Zero padding is semantically inert (padded rows/cols contribute nothing;
    # padded output rows/cols are sliced off) and is only materialized when the
    # shapes actually need it. dtypes are untouched -> no extra cast pass.
    if (n_p, f_in_p) != (N, F_in):
        x = jnp.pad(x, ((0, n_p - N), (0, f_in_p - F_in)))
    if (f_in_p, f_out_p) != (F_in, F_out):
        w = jnp.pad(w, ((0, f_in_p - F_in), (0, f_out_p - F_out)))
    if n_p != N:
        adj = jnp.pad(adj, ((0, n_p - N), (0, n_p - N)))
    if f_out_p != F_out:
        bias2d = jnp.pad(bias2d, ((0, 0), (0, f_out_p - F_out)))

    # Pass 1 tiles (pass 1 is a small fraction of total work; keep tiles modest
    # so a wide W never blows v7x's 64 MiB VMEM).
    bm1 = _pow2_tile(n_p, 256)
    bn1 = _pow2_tile(f_out_p, 256)
    support = _compute_support(x, w, bm=bm1, bn=bn1)     # (n_p, f_out_p) f32

    # Pass 2 tiles: big row tile amortizes support re-reads; cap so the
    # "parallel" row axis keeps >= 2 tiles (both v7x TensorCores busy).
    bm = _pow2_tile(n_p, block_m)
    if n_p // bm < 2 and bm > 128:
        bm //= 2
    bk = _pow2_tile(n_p, block_k)

    out_p = _aggregate(adj, support, bias2d, out_dtype, bm=bm, bk=bk)
    return out_p[:N, :F_out]


if __name__ == "__main__":
    key = jax.random.PRNGKey(0)
    kx, kadj, kw, kb, kx2, kadj2, kw2, kb2 = jax.random.split(key, 8)

    def make_inputs(kx_, kadj_, kw_, kb_, N, F_in, F_out):
        # Deterministic "reset_parameters": uniform(-stdv, stdv), stdv = 1/sqrt(F_out)
        stdv = 1.0 / math.sqrt(F_out)
        w = jax.random.uniform(kw_, (F_in, F_out), jnp.float32, -stdv, stdv)
        b = jax.random.uniform(kb_, (F_out,), jnp.float32, -stdv, stdv)
        x = jax.random.uniform(kx_, (N, F_in), jnp.float32)
        a = (jax.random.uniform(kadj_, (N, N), jnp.float32) > 0.8).astype(jnp.float32)
        a = a + jnp.eye(N, dtype=jnp.float32)
        a = a / jnp.sum(a, axis=1, keepdims=True)   # row-normalized adjacency
        return x, w, a, b

    # Module config: GraphConvolution(in_features=32, out_features=32, bias=True)
    # Small graph -> exercises the fused single-launch path.
    x, w, adj, b = make_inputs(kx, kadj, kw, kb, N=64, F_in=32, F_out=32)
    out = jax.block_until_ready(graph_convolution(x, w, adj, b))
    ref = adj @ (x @ w) + b
    assert out.shape == (64, 32)
    assert jnp.allclose(out, ref, atol=2e-2, rtol=2e-2), float(
        jnp.max(jnp.abs(out - ref)))

    # Slightly larger, non-128-aligned graph forced through the tiled two-pass
    # path (exercises padding, both pallas grids, and the k-loop epilogue).
    x2, w2, adj2, b2 = make_inputs(kx2, kadj2, kw2, kb2, N=192, F_in=48, F_out=96)
    out2 = jax.block_until_ready(
        graph_convolution(x2, w2, adj2, b2, fused_threshold_bytes=0))
    ref2 = adj2 @ (x2 @ w2) + b2
    assert out2.shape == (192, 96)
    assert jnp.allclose(out2, ref2, atol=2e-2, rtol=2e-2), float(
        jnp.max(jnp.abs(out2 - ref2)))

    print("KERNEL_OK")
</pallas_src>

<mosaic_0001>
module attributes {stable_mosaic.version = 11 : i64} {
  func.func @_fused_kernel(%arg0: memref<64x32xf32, #tpu.memory_space<vmem>>, %arg1: memref<32x32xf32, #tpu.memory_space<vmem>>, %arg2: memref<64x64xf32, #tpu.memory_space<vmem>>, %arg3: memref<1x32xf32, #tpu.memory_space<vmem>>, %arg4: memref<64x32xf32, #tpu.memory_space<vmem>>) attributes {dimension_semantics = [], scalar_prefetch = 0 : i64, scratch_operands = 0 : i64, tpu.core_type = #tpu.core_type<tc>} {
    %c0 = arith.constant 0 : index
    %c0_0 = arith.constant 0 : index
    %0 = vector.load %arg0[%c0, %c0_0] : memref<64x32xf32, #tpu.memory_space<vmem>>, vector<64x32xf32>
    %1 = arith.truncf %0 : vector<64x32xf32> to vector<64x32xbf16>
    %c0_1 = arith.constant 0 : index
    %c0_2 = arith.constant 0 : index
    %2 = vector.load %arg1[%c0_1, %c0_2] : memref<32x32xf32, #tpu.memory_space<vmem>>, vector<32x32xf32>
    %3 = arith.truncf %2 : vector<32x32xf32> to vector<32x32xbf16>
    %cst = arith.constant dense<0.000000e+00> : vector<64x32xf32>
    %4 = tpu.matmul %1, %3, %cst {dimension_numbers = #tpu.dot_dimension_numbers<[1], [0], [0], [1], [0, 0, 1, 1], [], []>} : vector<64x32xbf16>, vector<32x32xbf16>, vector<64x32xf32> -> vector<64x32xf32>
    %c0_3 = arith.constant 0 : index
    %c0_4 = arith.constant 0 : index
    %5 = vector.load %arg2[%c0_3, %c0_4] : memref<64x64xf32, #tpu.memory_space<vmem>>, vector<64x64xf32>
    %6 = arith.truncf %5 : vector<64x64xf32> to vector<64x64xbf16>
    %7 = arith.truncf %4 : vector<64x32xf32> to vector<64x32xbf16>
    %cst_5 = arith.constant dense<0.000000e+00> : vector<64x32xf32>
    %8 = tpu.matmul %6, %7, %cst_5 {dimension_numbers = #tpu.dot_dimension_numbers<[1], [0], [0], [1], [0, 0, 1, 1], [], []>} : vector<64x64xbf16>, vector<64x32xbf16>, vector<64x32xf32> -> vector<64x32xf32>
    %c0_6 = arith.constant 0 : index
    %c0_7 = arith.constant 0 : index
    %9 = vector.load %arg3[%c0_6, %c0_7] : memref<1x32xf32, #tpu.memory_space<vmem>>, vector<1x32xf32>
    %10 = vector.broadcast %9 : vector<1x32xf32> to vector<64x32xf32>
    %11 = arith.addf %8, %10 : vector<64x32xf32>
    %c0_8 = arith.constant 0 : index
    %c0_9 = arith.constant 0 : index
    %12 = vector.load %arg4[%c0_8, %c0_9] : memref<64x32xf32, #tpu.memory_space<vmem>>, vector<64x32xf32>
    tpu.vector_store %arg4[%c0_8, %c0_9], %11 {strides = array<i32>} : memref<64x32xf32, #tpu.memory_space<vmem>>, vector<64x32xf32>,
    return
  }
}

</mosaic_0001>

<llo_original>
// kernel: graph_convolution.1
$region0: #{graph_convolution.1}
  #allocation0 [shape = 'u32[]', space=smem, size = 0x4, offset = 0x4, fixed_abs, tag = 'smem constant byte address 0x4 - core index']
  #allocation1 [shape = 'u32[144,128]{1,0:T(1,128)}', space=vmem, size = 0x12000, scoped, tag = 'internal scratch']
  %s0 = inlined_call_operand.vmem [shape: f32[64,32], index: 0, kind: input, shape index: {}]
  %s1 = inlined_call_operand.vmem [shape: f32[32,32], index: 1, kind: input, shape index: {}]
  %s2 = inlined_call_operand.vmem [shape: f32[64,64], index: 2, kind: input, shape index: {}]
  %s3 = inlined_call_operand.vmem [shape: f32[1,32], index: 3, kind: input, shape index: {}]
  %s4 = inlined_call_operand.vmem [shape: f32[64,32], index: 4, kind: output, shape index: {}]
  %s5 = sld [smem:[#allocation0]]
  $region26: #{graph_convolution.1} parent=0
    _
  %s7 = ssub.s32 1, %s5
  %s8 = scalar_select 0, %s7, %s5
  // Predicated region
  $region2: #{graph_convolution.1} parent=0 // pred_check
    _
  $region3: #{graph_convolution.1} parent=0 // pred_check_branch
    %10 = sbr.rel (0) target = $region5
  $region4: #{graph_convolution.1} parent=0 // pred_region
    _
  $region5: #{graph_convolution.1} parent=0 // pred_fallthru
    _
  // Predicated region
  $region6: #{graph_convolution.1} parent=0 // pred_check
    _
  $region7: #{graph_convolution.1} parent=0 // pred_check_branch
    %12 = sbr.rel (0) target = $region9
  $region8: #{graph_convolution.1} parent=0 // pred_region
    _
  $region9: #{graph_convolution.1} parent=0 // pred_fallthru
    _
  // Predicated region
  $region10: #{graph_convolution.1} parent=0 // pred_check
    _
  $region11: #{graph_convolution.1} parent=0 // pred_check_branch
    %14 = sbr.rel (0) target = $region13
  $region12: #{graph_convolution.1} parent=0 // pred_region
    _
  $region13: #{graph_convolution.1} parent=0 // pred_fallthru
    _
  // Predicated region
  $region14: #{graph_convolution.1} parent=0 // pred_check
    _
  $region15: #{graph_convolution.1} parent=0 // pred_check_branch
    %16 = sbr.rel (0) target = $region17
  $region16: #{graph_convolution.1} parent=0 // pred_region
    _
  $region17: #{graph_convolution.1} parent=0 // pred_fallthru
    _
  %v18 = vld [vmem:[%s0] sm:$0xff]
  %v19 = vld [vmem:[%s0 + $0x8] sm:$0xff]
  %v20 = vld [vmem:[%s0 + $0x10] sm:$0xff]
  %v21 = vld [vmem:[%s0 + $0x18] sm:$0xff]
  %v22 = vld [vmem:[%s0 + $0x20] sm:$0xff]
  %v23 = vld [vmem:[%s0 + $0x28] sm:$0xff]
  %v24 = vld [vmem:[%s0 + $0x30] sm:$0xff]
  %v25 = vld [vmem:[%s0 + $0x38] sm:$0xff]
  %v26 = vpack.c.bf16 %v19, %v18
  %v27 = vpack.c.bf16 %v21, %v20
  %v28 = vpack.c.bf16 %v23, %v22
  %v29 = vpack.c.bf16 %v25, %v24
  %v30 = vld [vmem:[%s1] sm:$0xff]
  %v31 = vld [vmem:[%s1 + $0x8] sm:$0xff]
  %v32 = vld [vmem:[%s1 + $0x10] sm:$0xff]
  %v33 = vld [vmem:[%s1 + $0x18] sm:$0xff]
  %v34 = vpack.c.bf16 %v31, %v30
  %v35 = vpack.c.bf16 %v33, %v32
  %vm36 = vcmask 261120
  %v38 = vsel %vm36, %v26, 0
  %v41 = vsel %vm36, %v27, 0
  %v44 = vsel %vm36, %v28, 0
  %v47 = vsel %vm36, %v29, 0
  %49 = vmatprep.subr.bf16.mxu0 0
  %50 = vmatpush1.bf16.msra.mxu0 %v34
  %51 = vmatprep.subr.bf16.mxu0 0
  %52 = vmatpush1.bf16.msra.mxu0 %v35
  %53 = vmatprep.subr.bf16.mxu0 0
  %54 = vmatpush1.bf16.msra.mxu0 0
  %55 = vmatprep.subr.bf16.mxu0 0
  %56 = vmatpush1.bf16.msra.mxu0 0
  %57 = vmatprep.subr.bf16.mxu0 0
  %58 = vmatpush1.bf16.msra.mxu0 0
  %59 = vmatprep.subr.bf16.mxu0 0
  %60 = vmatpush1.bf16.msra.mxu0 0
  %61 = vmatprep.subr.bf16.mxu0 0
  %62 = vmatpush1.bf16.msra.mxu0 0
  %63 = vmatprep.subr.bf16.mxu0 0
  %64 = vmatpush1.bf16.msra.mxu0 0
  %65 = vmatprep.subr.bf16.mxu0 0
  %66 = vmatpush1.bf16.msra.mxu0 0
  %67 = vmatprep.subr.bf16.mxu0 0
  %68 = vmatpush1.bf16.msra.mxu0 0
  %69 = vmatprep.subr.bf16.mxu0 0
  %70 = vmatpush1.bf16.msra.mxu0 0
  %71 = vmatprep.subr.bf16.mxu0 0
  %72 = vmatpush1.bf16.msra.mxu0 0
  %73 = vmatprep.subr.bf16.mxu0 0
  %74 = vmatpush1.bf16.msra.mxu0 0
  %75 = vmatprep.subr.bf16.mxu0 0
  %76 = vmatpush1.bf16.msra.mxu0 0
  %77 = vmatprep.subr.bf16.mxu0 0
  %78 = vmatpush1.bf16.msra.mxu0 0
  %79 = vmatprep.subr.bf16.mxu0 0
  %80 = vmatpush1.bf16.msra.mxu0 0
  %81 = vmatprep.mubr.bf16.mxu0 0
  %82 = vmatmul.mubr.bf16.gmra.mrb[0].mxu0 %v38
  %v83 = vpop.f32.mrb[0].mxu0
  %v84 = vadd.f32 0.0, %v83
  %v85 = vpop.f32.mrb[0].mxu0
  %v86 = vpop.f32.mrb[0].mxu0
  %v87 = vadd.f32 0.0, %v86
  %v88 = vpop.f32.mrb[0].mxu0
  %89 = vmatprep.mubr.bf16.mxu0 0
  %90 = vmatmul.mubr.bf16.gmra.mrb[0].mxu0 %v41
  %v91 = vpop.f32.mrb[0].mxu0
  %v92 = vadd.f32 0.0, %v91
  %v93 = vpop.f32.mrb[0].mxu0
  %v94 = vpop.f32.mrb[0].mxu0
  %v95 = vadd.f32 0.0, %v94
  %v96 = vpop.f32.mrb[0].mxu0
  %97 = vmatprep.mubr.bf16.mxu0 0
  %98 = vmatmul.mubr.bf16.gmra.mrb[0].mxu0 %v44
  %v99 = vpop.f32.mrb[0].mxu0
  %v100 = vadd.f32 0.0, %v99
  %v101 = vpop.f32.mrb[0].mxu0
  %v102 = vpop.f32.mrb[0].mxu0
  %v103 = vadd.f32 0.0, %v102
  %v104 = vpop.f32.mrb[0].mxu0
  %105 = vmatprep.mubr.bf16.mxu0 0
  %106 = vmatmul.mubr.bf16.gmra.mrb[0].mxu0 %v47
  %v107 = vpop.f32.mrb[0].mxu0
  %v108 = vadd.f32 0.0, %v107
  %v109 = vpop.f32.mrb[0].mxu0
  %v110 = vpop.f32.mrb[0].mxu0
  %v111 = vadd.f32 0.0, %v110
  %v112 = vpop.f32.mrb[0].mxu0
  %113 = vdwg.mxu0
  %v114 = vld [vmem:[%s2] sm:$0xff]
  %v115 = vld [vmem:[%s2 + $0x8] sm:$0xff]
  %v116 = vld [vmem:[%s2 + $0x10] sm:$0xff]
  %v117 = vld [vmem:[%s2 + $0x18] sm:$0xff]
  %v118 = vld [vmem:[%s2 + $0x20] sm:$0xff]
  %v119 = vld [vmem:[%s2 + $0x28] sm:$0xff]
  %v120 = vld [vmem:[%s2 + $0x30] sm:$0xff]
  %v121 = vld [vmem:[%s2 + $0x38] sm:$0xff]
  %v122 = vpack.c.bf16 %v115, %v114
  %v123 = vpack.c.bf16 %v117, %v116
  %v124 = vpack.c.bf16 %v119, %v118
  %v125 = vpack.c.bf16 %v121, %v120
  %v126 = vpack.c.bf16 %v87, %v84
  %v127 = vpack.c.bf16 %v95, %v92
  %v128 = vpack.c.bf16 %v103, %v100
  %v129 = vpack.c.bf16 %v111, %v108
  %v130 = vld [vmem:[%s3] sm:$0x1]
  %v132 = vlaneseq
  %v133 = vshrl.u32 %v132, 7
  %v134 = vsub.s32 0, %v133
  %v135 = vrot.slane %v130, %v134
  %vm137 = vcmask 523264
  %v139 = vsel %vm137, %v122, 0
  %v142 = vsel %vm137, %v123, 0
  %v145 = vsel %vm137, %v124, 0
  %v148 = vsel %vm137, %v125, 0
  %150 = vmatprep.subr.bf16.mxu0 0
  %151 = vmatpush1.bf16.msra.mxu0 %v126
  %152 = vmatprep.subr.bf16.mxu0 0
  %153 = vmatpush1.bf16.msra.mxu0 %v127
  %154 = vmatprep.subr.bf16.mxu0 0
  %155 = vmatpush1.bf16.msra.mxu0 %v128
  %156 = vmatprep.subr.bf16.mxu0 0
  %157 = vmatpush1.bf16.msra.mxu0 %v129
  %158 = vmatprep.subr.bf16.mxu0 0
  %159 = vmatpush1.bf16.msra.mxu0 0
  %160 = vmatprep.subr.bf16.mxu0 0
  %161 = vmatpush1.bf16.msra.mxu0 0
  %162 = vmatprep.subr.bf16.mxu0 0
  %163 = vmatpush1.bf16.msra.mxu0 0
  %164 = vmatprep.subr.bf16.mxu0 0
  %165 = vmatpush1.bf16.msra.mxu0 0
  %166 = vmatprep.subr.bf16.mxu0 0
  %167 = vmatpush1.bf16.msra.mxu0 0
  %168 = vmatprep.subr.bf16.mxu0 0
  %169 = vmatpush1.bf16.msra.mxu0 0
  %170 = vmatprep.subr.bf16.mxu0 0
  %171 = vmatpush1.bf16.msra.mxu0 0
  %172 = vmatprep.subr.bf16.mxu0 0
  %173 = vmatpush1.bf16.msra.mxu0 0
  %174 = vmatprep.subr.bf16.mxu0 0
  %175 = vmatpush1.bf16.msra.mxu0 0
  %176 = vmatprep.subr.bf16.mxu0 0
  %177 = vmatpush1.bf16.msra.mxu0 0
  %178 = vmatprep.subr.bf16.mxu0 0
  %179 = vmatpush1.bf16.msra.mxu0 0
  %180 = vmatprep.subr.bf16.mxu0 0
  %181 = vmatpush1.bf16.msra.mxu0 0
  %182 = vmatprep.mubr.bf16.mxu0 0
  %183 = vmatmul.mubr.bf16.gmra.mrb[0].mxu0 %v139
  %v184 = vpop.f32.mrb[0].mxu0
  %v185 = vadd.f32 %v135, %v184
  %v186 = vpop.f32.mrb[0].mxu0
  %v187 = vpop.f32.mrb[0].mxu0
  %v188 = vadd.f32 %v135, %v187
  %v189 = vpop.f32.mrb[0].mxu0
  %190 = vmatprep.mubr.bf16.mxu0 0
  %191 = vmatmul.mubr.bf16.gmra.mrb[0].mxu0 %v142
  %v192 = vpop.f32.mrb[0].mxu0
  %v193 = vadd.f32 %v135, %v192
  %v194 = vpop.f32.mrb[0].mxu0
  %v195 = vpop.f32.mrb[0].mxu0
  %v196 = vadd.f32 %v135, %v195
  %v197 = vpop.f32.mrb[0].mxu0
  %198 = vmatprep.mubr.bf16.mxu0 0
  %199 = vmatmul.mubr.bf16.gmra.mrb[0].mxu0 %v145
  %v200 = vpop.f32.mrb[0].mxu0
  %v201 = vadd.f32 %v135, %v200
  %v202 = vpop.f32.mrb[0].mxu0
  %v203 = vpop.f32.mrb[0].mxu0
  %v204 = vadd.f32 %v135, %v203
  %v205 = vpop.f32.mrb[0].mxu0
  %206 = vmatprep.mubr.bf16.mxu0 0
  %207 = vmatmul.mubr.bf16.gmra.mrb[0].mxu0 %v148
  %v208 = vpop.f32.mrb[0].mxu0
  %v209 = vadd.f32 %v135, %v208
  %v210 = vpop.f32.mrb[0].mxu0
  %v211 = vpop.f32.mrb[0].mxu0
  %v212 = vadd.f32 %v135, %v211
  %v213 = vpop.f32.mrb[0].mxu0
  %214 = vdwg.mxu0
  %215 = vst.msk [vmem:[%s4] sm:$0xff] %vm36, %v185
  %216 = vst.msk [vmem:[%s4 + $0x8] sm:$0xff] %vm36, %v188
  %217 = vst.msk [vmem:[%s4 + $0x10] sm:$0xff] %vm36, %v193
  %218 = vst.msk [vmem:[%s4 + $0x18] sm:$0xff] %vm36, %v196
  %219 = vst.msk [vmem:[%s4 + $0x20] sm:$0xff] %vm36, %v201
  %220 = vst.msk [vmem:[%s4 + $0x28] sm:$0xff] %vm36, %v204
  %221 = vst.msk [vmem:[%s4 + $0x30] sm:$0xff] %vm36, %v209
  %222 = vst.msk [vmem:[%s4 + $0x38] sm:$0xff] %vm36, %v212
  // Predicated region
  $region18: #{graph_convolution.1} parent=0 // pred_check
    _
  $region19: #{graph_convolution.1} parent=0 // pred_check_branch
    %224 = sbr.rel (0) target = $region21
  $region20: #{graph_convolution.1} parent=0 // pred_region
    _
  $region21: #{graph_convolution.1} parent=0 // pred_fallthru
    _
  // Predicated region
  $region22: #{graph_convolution.1} parent=0 // pred_check
    _
  $region23: #{graph_convolution.1} parent=0 // pred_check_branch
    %226 = sbr.rel (0) target = $region25
  $region24: #{graph_convolution.1} parent=0 // pred_region
    _
  $region25: #{graph_convolution.1} parent=0 // pred_fallthru
    _

</llo_original>
